<compile_context>
chip_gen: v6e
topology: v6e:2x2x1
jax: 0.10.0
libtpu: 0.0.40
codegen_flags: <defaults>
</compile_context>

<pallas_src>
import functools

import jax
import jax.numpy as jnp
from jax.experimental import pallas as pl
from jax.experimental.pallas import tpu as pltpu

DIMS = [14, 60, 100, 48, 10, 2]
N_LAYERS = len(DIMS) - 1
F_PAD = 128  # all feature dims padded to one full lane width


def _round_up(n, m):
    return ((n + m - 1) // m) * m


def mlp_kernel(x_ref, w_ref, b_ref, o_ref):
    # x_ref: (TILE_B, 128) f32, w_ref: (5, 128, 128) bf16, b_ref: (5, 1, 128) f32
    h = x_ref[...]
    for l in range(N_LAYERS):  # static unrolled loop over the 5 layers
        z = jnp.dot(h.astype(jnp.bfloat16), w_ref[l],
                    preferred_element_type=jnp.float32) + b_ref[l]
        h = jax.nn.sigmoid(z)  # f32 elementwise (v5e-safe)
    o_ref[...] = h.astype(o_ref.dtype)


def pack_params(params):
    """Zero-pad each layer to 128x128 and pack weights/biases into two arrays."""
    w_packed = jnp.zeros((N_LAYERS, F_PAD, F_PAD), jnp.float32)
    b_packed = jnp.zeros((N_LAYERS, 1, F_PAD), jnp.float32)
    for l, (w, b) in enumerate(params):
        fin, fout = w.shape
        w_packed = w_packed.at[l, :fin, :fout].set(w)
        b_packed = b_packed.at[l, 0, :fout].set(b.reshape(-1))
    # Weights resident in VMEM as bf16 (MXU-native); padding zeros stay exact.
    return w_packed.astype(jnp.bfloat16), b_packed


@functools.partial(jax.jit, static_argnames=("tile_b",))
def net_forward(x, w_packed, b_packed, *, tile_b=2048):
    B, f_in = x.shape
    # Effective batch tile: multiple of 8, never larger than the (padded) batch.
    tile = min(tile_b, _round_up(B, 8))
    tile = _round_up(tile, 8)
    b_pad = _round_up(B, tile)

    x_pad = jnp.zeros((b_pad, F_PAD), jnp.float32).at[:B, :f_in].set(x)

    out_pad = pl.pallas_call(
        mlp_kernel,
        out_shape=jax.ShapeDtypeStruct((b_pad, F_PAD), jnp.float32),
        grid=(b_pad // tile,),
        in_specs=[
            pl.BlockSpec((tile, F_PAD), lambda i: (i, 0)),          # x: batch-tiled
            pl.BlockSpec((N_LAYERS, F_PAD, F_PAD), lambda i: (0, 0, 0)),  # weights resident
            pl.BlockSpec((N_LAYERS, 1, F_PAD), lambda i: (0, 0, 0)),      # biases resident
        ],
        out_specs=pl.BlockSpec((tile, F_PAD), lambda i: (i, 0)),    # lane-dense output
        compiler_params=pltpu.CompilerParams(
            dimension_semantics=("parallel",)),
    )(x_pad, w_packed, b_packed)

    return out_pad[:B, :DIMS[-1]]


def init_params(key):
    params = []
    for i in range(N_LAYERS):
        fan_in, fan_out = DIMS[i], DIMS[i + 1]
        key, kw, kb = jax.random.split(key, 3)
        # PyTorch nn.Linear default init: U(-1/sqrt(fan_in), 1/sqrt(fan_in))
        bound = 1.0 / jnp.sqrt(fan_in)
        w = jax.random.uniform(kw, (fan_in, fan_out), jnp.float32, -bound, bound)
        b = jax.random.uniform(kb, (1, fan_out), jnp.float32, -bound, bound)
        params.append((w, b))
    return params


def reference_forward(x, params):
    # Pure-JAX reference matching the kernel math (bf16 dot inputs, f32 accum).
    h = x
    for w, b in params:
        z = jnp.dot(h.astype(jnp.bfloat16), w.astype(jnp.bfloat16),
                    preferred_element_type=jnp.float32) + b
        h = jax.nn.sigmoid(z)
    return h


if __name__ == "__main__":
    key = jax.random.PRNGKey(0)
    key, kx1, kx2 = jax.random.split(key, 3)
    params = init_params(key)
    w_packed, b_packed = pack_params(params)

    # Small test matching the module (single grid step).
    B = 8
    x = jax.random.normal(kx1, (B, 14), jnp.float32)
    out = jax.block_until_ready(net_forward(x, w_packed, b_packed))
    ref = reference_forward(x, params)
    assert out.shape == (B, 2)
    assert jnp.allclose(out, ref, atol=1e-5, rtol=1e-5)

    # Exercise the batch grid (multiple tiles + padding of a ragged batch).
    B2 = 40
    x2 = jax.random.normal(kx2, (B2, 14), jnp.float32)
    out2 = jax.block_until_ready(net_forward(x2, w_packed, b_packed, tile_b=16))
    ref2 = reference_forward(x2, params)
    assert out2.shape == (B2, 2)
    assert jnp.allclose(out2, ref2, atol=1e-5, rtol=1e-5)

    print("KERNEL_OK")
</pallas_src>

<mosaic_0001>
module attributes {stable_mosaic.version = 11 : i64} {
  func.func @mlp_kernel(%arg0: i32, %arg1: memref<8x128xf32, #tpu.memory_space<vmem>>, %arg2: memref<5x128x128xbf16, #tpu.memory_space<vmem>>, %arg3: memref<5x1x128xf32, #tpu.memory_space<vmem>>, %arg4: memref<8x128xf32, #tpu.memory_space<vmem>>) attributes {dimension_semantics = [#tpu.dimension_semantics<parallel>], iteration_bounds = array<i64: 1>, scalar_prefetch = 0 : i64, scratch_operands = 0 : i64, tpu.core_type = #tpu.core_type<tc>, window_params = [{transform_indices = @transform_0, window_bounds = array<i64: 8, 128>}, {pipeline_mode = #tpu.pipeline_mode<synchronous>, transform_indices = @transform_1, window_bounds = array<i64: 5, 128, 128>}, {pipeline_mode = #tpu.pipeline_mode<synchronous>, transform_indices = @transform_2, window_bounds = array<i64: 5, 1, 128>}, {transform_indices = @transform_3, window_bounds = array<i64: 8, 128>}]} {
    %c0 = arith.constant 0 : index
    %c0_0 = arith.constant 0 : index
    %0 = vector.load %arg1[%c0, %c0_0] : memref<8x128xf32, #tpu.memory_space<vmem>>, vector<8x128xf32>
    %1 = arith.truncf %0 : vector<8x128xf32> to vector<8x128xbf16>
    %c0_1 = arith.constant 0 : index
    %c0_2 = arith.constant 0 : index
    %c0_3 = arith.constant 0 : index
    %2 = vector.load %arg2[%c0_1, %c0_2, %c0_3] : memref<5x128x128xbf16, #tpu.memory_space<vmem>>, vector<1x128x128xbf16>
    %3 = vector.shape_cast %2 : vector<1x128x128xbf16> to vector<128x128xbf16>
    %cst = arith.constant dense<0.000000e+00> : vector<8x128xf32>
    %4 = tpu.matmul %1, %3, %cst {dimension_numbers = #tpu.dot_dimension_numbers<[1], [0], [0], [1], [0, 0, 1, 1], [], []>} : vector<8x128xbf16>, vector<128x128xbf16>, vector<8x128xf32> -> vector<8x128xf32>
    %c0_4 = arith.constant 0 : index
    %c0_5 = arith.constant 0 : index
    %c0_6 = arith.constant 0 : index
    %5 = vector.load %arg3[%c0_4, %c0_5, %c0_6] : memref<5x1x128xf32, #tpu.memory_space<vmem>>, vector<1x1x128xf32>
    %6 = vector.shape_cast %5 : vector<1x1x128xf32> to vector<1x128xf32>
    %7 = vector.broadcast %6 : vector<1x128xf32> to vector<8x128xf32>
    %8 = arith.addf %4, %7 : vector<8x128xf32>
    %9 = arith.negf %8 : vector<8x128xf32>
    %10 = math.exp %9 : vector<8x128xf32>
    %cst_7 = arith.constant 1.000000e+00 : f32
    %11 = vector.broadcast %cst_7 : f32 to vector<8x128xf32>
    %12 = arith.addf %11, %10 : vector<8x128xf32>
    %13 = arith.divf %11, %12 : vector<8x128xf32>
    %14 = arith.truncf %13 : vector<8x128xf32> to vector<8x128xbf16>
    %c1 = arith.constant 1 : index
    %c0_8 = arith.constant 0 : index
    %c0_9 = arith.constant 0 : index
    %15 = vector.load %arg2[%c1, %c0_8, %c0_9] : memref<5x128x128xbf16, #tpu.memory_space<vmem>>, vector<1x128x128xbf16>
    %16 = vector.shape_cast %15 : vector<1x128x128xbf16> to vector<128x128xbf16>
    %cst_10 = arith.constant dense<0.000000e+00> : vector<8x128xf32>
    %17 = tpu.matmul %14, %16, %cst_10 {dimension_numbers = #tpu.dot_dimension_numbers<[1], [0], [0], [1], [0, 0, 1, 1], [], []>} : vector<8x128xbf16>, vector<128x128xbf16>, vector<8x128xf32> -> vector<8x128xf32>
    %c1_11 = arith.constant 1 : index
    %c0_12 = arith.constant 0 : index
    %c0_13 = arith.constant 0 : index
    %18 = vector.load %arg3[%c1_11, %c0_12, %c0_13] : memref<5x1x128xf32, #tpu.memory_space<vmem>>, vector<1x1x128xf32>
    %19 = vector.shape_cast %18 : vector<1x1x128xf32> to vector<1x128xf32>
    %20 = vector.broadcast %19 : vector<1x128xf32> to vector<8x128xf32>
    %21 = arith.addf %17, %20 : vector<8x128xf32>
    %22 = arith.negf %21 : vector<8x128xf32>
    %23 = math.exp %22 : vector<8x128xf32>
    %cst_14 = arith.constant 1.000000e+00 : f32
    %24 = vector.broadcast %cst_14 : f32 to vector<8x128xf32>
    %25 = arith.addf %24, %23 : vector<8x128xf32>
    %26 = arith.divf %24, %25 : vector<8x128xf32>
    %27 = arith.truncf %26 : vector<8x128xf32> to vector<8x128xbf16>
    %c2 = arith.constant 2 : index
    %c0_15 = arith.constant 0 : index
    %c0_16 = arith.constant 0 : index
    %28 = vector.load %arg2[%c2, %c0_15, %c0_16] : memref<5x128x128xbf16, #tpu.memory_space<vmem>>, vector<1x128x128xbf16>
    %29 = vector.shape_cast %28 : vector<1x128x128xbf16> to vector<128x128xbf16>
    %cst_17 = arith.constant dense<0.000000e+00> : vector<8x128xf32>
    %30 = tpu.matmul %27, %29, %cst_17 {dimension_numbers = #tpu.dot_dimension_numbers<[1], [0], [0], [1], [0, 0, 1, 1], [], []>} : vector<8x128xbf16>, vector<128x128xbf16>, vector<8x128xf32> -> vector<8x128xf32>
    %c2_18 = arith.constant 2 : index
    %c0_19 = arith.constant 0 : index
    %c0_20 = arith.constant 0 : index
    %31 = vector.load %arg3[%c2_18, %c0_19, %c0_20] : memref<5x1x128xf32, #tpu.memory_space<vmem>>, vector<1x1x128xf32>
    %32 = vector.shape_cast %31 : vector<1x1x128xf32> to vector<1x128xf32>
    %33 = vector.broadcast %32 : vector<1x128xf32> to vector<8x128xf32>
    %34 = arith.addf %30, %33 : vector<8x128xf32>
    %35 = arith.negf %34 : vector<8x128xf32>
    %36 = math.exp %35 : vector<8x128xf32>
    %cst_21 = arith.constant 1.000000e+00 : f32
    %37 = vector.broadcast %cst_21 : f32 to vector<8x128xf32>
    %38 = arith.addf %37, %36 : vector<8x128xf32>
    %39 = arith.divf %37, %38 : vector<8x128xf32>
    %40 = arith.truncf %39 : vector<8x128xf32> to vector<8x128xbf16>
    %c3 = arith.constant 3 : index
    %c0_22 = arith.constant 0 : index
    %c0_23 = arith.constant 0 : index
    %41 = vector.load %arg2[%c3, %c0_22, %c0_23] : memref<5x128x128xbf16, #tpu.memory_space<vmem>>, vector<1x128x128xbf16>
    %42 = vector.shape_cast %41 : vector<1x128x128xbf16> to vector<128x128xbf16>
    %cst_24 = arith.constant dense<0.000000e+00> : vector<8x128xf32>
    %43 = tpu.matmul %40, %42, %cst_24 {dimension_numbers = #tpu.dot_dimension_numbers<[1], [0], [0], [1], [0, 0, 1, 1], [], []>} : vector<8x128xbf16>, vector<128x128xbf16>, vector<8x128xf32> -> vector<8x128xf32>
    %c3_25 = arith.constant 3 : index
    %c0_26 = arith.constant 0 : index
    %c0_27 = arith.constant 0 : index
    %44 = vector.load %arg3[%c3_25, %c0_26, %c0_27] : memref<5x1x128xf32, #tpu.memory_space<vmem>>, vector<1x1x128xf32>
    %45 = vector.shape_cast %44 : vector<1x1x128xf32> to vector<1x128xf32>
    %46 = vector.broadcast %45 : vector<1x128xf32> to vector<8x128xf32>
    %47 = arith.addf %43, %46 : vector<8x128xf32>
    %48 = arith.negf %47 : vector<8x128xf32>
    %49 = math.exp %48 : vector<8x128xf32>
    %cst_28 = arith.constant 1.000000e+00 : f32
    %50 = vector.broadcast %cst_28 : f32 to vector<8x128xf32>
    %51 = arith.addf %50, %49 : vector<8x128xf32>
    %52 = arith.divf %50, %51 : vector<8x128xf32>
    %53 = arith.truncf %52 : vector<8x128xf32> to vector<8x128xbf16>
    %c4 = arith.constant 4 : index
    %c0_29 = arith.constant 0 : index
    %c0_30 = arith.constant 0 : index
    %54 = vector.load %arg2[%c4, %c0_29, %c0_30] : memref<5x128x128xbf16, #tpu.memory_space<vmem>>, vector<1x128x128xbf16>
    %55 = vector.shape_cast %54 : vector<1x128x128xbf16> to vector<128x128xbf16>
    %cst_31 = arith.constant dense<0.000000e+00> : vector<8x128xf32>
    %56 = tpu.matmul %53, %55, %cst_31 {dimension_numbers = #tpu.dot_dimension_numbers<[1], [0], [0], [1], [0, 0, 1, 1], [], []>} : vector<8x128xbf16>, vector<128x128xbf16>, vector<8x128xf32> -> vector<8x128xf32>
    %c4_32 = arith.constant 4 : index
    %c0_33 = arith.constant 0 : index
    %c0_34 = arith.constant 0 : index
    %57 = vector.load %arg3[%c4_32, %c0_33, %c0_34] : memref<5x1x128xf32, #tpu.memory_space<vmem>>, vector<1x1x128xf32>
    %58 = vector.shape_cast %57 : vector<1x1x128xf32> to vector<1x128xf32>
    %59 = vector.broadcast %58 : vector<1x128xf32> to vector<8x128xf32>
    %60 = arith.addf %56, %59 : vector<8x128xf32>
    %61 = arith.negf %60 : vector<8x128xf32>
    %62 = math.exp %61 : vector<8x128xf32>
    %cst_35 = arith.constant 1.000000e+00 : f32
    %63 = vector.broadcast %cst_35 : f32 to vector<8x128xf32>
    %64 = arith.addf %63, %62 : vector<8x128xf32>
    %65 = arith.divf %63, %64 : vector<8x128xf32>
    %c0_36 = arith.constant 0 : index
    %c0_37 = arith.constant 0 : index
    %66 = vector.load %arg4[%c0_36, %c0_37] : memref<8x128xf32, #tpu.memory_space<vmem>>, vector<8x128xf32>
    tpu.vector_store %arg4[%c0_36, %c0_37], %65 {strides = array<i32>} : memref<8x128xf32, #tpu.memory_space<vmem>>, vector<8x128xf32>,
    return
  }
  func.func @transform_0(%arg0: i32) -> (i32, i32) {
    %c0_i32 = arith.constant 0 : i32
    %c0_i32_0 = arith.constant 0 : i32
    return %arg0, %c0_i32 : i32, i32
  }
  func.func @transform_1(%arg0: i32) -> (i32, i32, i32) {
    %c0_i32 = arith.constant 0 : i32
    %c0_i32_0 = arith.constant 0 : i32
    %c0_i32_1 = arith.constant 0 : i32
    %c0_i32_2 = arith.constant 0 : i32
    return %c0_i32, %c0_i32_0, %c0_i32_1 : i32, i32, i32
  }
  func.func @transform_2(%arg0: i32) -> (i32, i32, i32) {
    %c0_i32 = arith.constant 0 : i32
    %c0_i32_0 = arith.constant 0 : i32
    %c0_i32_1 = arith.constant 0 : i32
    %c0_i32_2 = arith.constant 0 : i32
    return %c0_i32, %c0_i32_0, %c0_i32_1 : i32, i32, i32
  }
  func.func @transform_3(%arg0: i32) -> (i32, i32) {
    %c0_i32 = arith.constant 0 : i32
    %c0_i32_0 = arith.constant 0 : i32
    return %arg0, %c0_i32 : i32, i32
  }
}

</mosaic_0001>

<llo_original>
// kernel: net_forward.1
$region0: #{net_forward.1}
  #allocation0 [shape = 'u32[]', space=smem, size = 0x4, offset = 0x4, fixed_abs, tag = 'smem constant byte address 0x4 - core index']
  #allocation1 [shape = 'u32[144,128]{1,0:T(1,128)}', space=vmem, size = 0x12000, scoped, tag = 'internal scratch']
  %s0 = inlined_call_operand.vmem [shape: f32[8,128], index: 0, kind: input, shape index: {}]
  %s1 = inlined_call_operand.hbm [shape: bf16[5,128,128], index: 1, kind: input, shape index: {}]
  %s2 = inlined_call_operand.vmem [shape: f32[5,1,128], index: 2, kind: input, shape index: {}]
  %s3 = inlined_call_operand.vmem [shape: f32[8,128], index: 3, kind: output, shape index: {}]
  %s4 = sld [smem:[#allocation0]]
  $region26: #{net_forward.1} parent=0
    _
  %s6 = ssub.s32 1, %s4
  %s7 = scalar_select 0, %s6, %s4
  $region1: #{net_forward.1} parent=0
    #allocation2 [shape = 'u8[163840]{0}', space=vmem, size = 0x28000, scoped, tag = 'input window, operand 1, single buffered']
    #allocation3 [shape = 's32[1]{0}', space=sflag, size = 0x4, scoped, tag = 'scoped memory for net_forward.1']
    %8 = vsyncpa [#allocation3], 0
    // Predicated region
    $region2: #{net_forward.1} parent=1 // pred_check
      _
    $region3: #{net_forward.1} parent=1 // pred_check_branch
      %10 = sbr.rel (0) target = $region5
    $region4: #{net_forward.1} parent=1 // pred_region
      _
    $region5: #{net_forward.1} parent=1 // pred_fallthru
      _
    // Predicated region
    $region6: #{net_forward.1} parent=1 // pred_check
      _
    $region7: #{net_forward.1} parent=1 // pred_check_branch
      %12 = sbr.rel (0) target = $region9
    $region8: #{net_forward.1} parent=1 // pred_region
      %s14 = ssub.s32 5120, 5120
      %15 = vsyncadd [#allocation3], %s14
      %s16 = sshll.u32 [#allocation2], 4
      %s17 = int_to_ptr.vmem [resolvable:$true] %s16
      %22 = dma.hbm_to_vmem [thread:$0]  %s1, 5120, %s17, [#allocation3], 64, 64, 4
    $region9: #{net_forward.1} parent=1 // pred_fallthru
      _
    // Predicated region
    $region10: #{net_forward.1} parent=1 // pred_check
      _
    $region11: #{net_forward.1} parent=1 // pred_check_branch
      %24 = sbr.rel (0) target = $region13
    $region12: #{net_forward.1} parent=1 // pred_region
      _
    $region13: #{net_forward.1} parent=1 // pred_fallthru
      _
    // Predicated region
    $region14: #{net_forward.1} parent=1 // pred_check
      _
    $region15: #{net_forward.1} parent=1 // pred_check_branch
      %26 = sbr.rel (0) target = $region17
    $region16: #{net_forward.1} parent=1 // pred_region
      %27 = dma.done [#allocation3], 5120
    $region17: #{net_forward.1} parent=1 // pred_fallthru
      _
    %v29 = vld [vmem:[%s0] sm:$0xff]
    %v30 = vpack.c.bf16 %v29, %v29
    %v31 = vld [vmem:[#allocation2] sm:$0xf]
    %v32 = vld [vmem:[#allocation2 + $0x4] sm:$0xf]
    %v33 = vld [vmem:[#allocation2 + $0x8] sm:$0xf]
    %v34 = vld [vmem:[#allocation2 + $0xc] sm:$0xf]
    %v35 = vld [vmem:[#allocation2 + $0x10] sm:$0xf]
    %v36 = vld [vmem:[#allocation2 + $0x14] sm:$0xf]
    %v37 = vld [vmem:[#allocation2 + $0x18] sm:$0xf]
    %v38 = vld [vmem:[#allocation2 + $0x1c] sm:$0xf]
    %v39 = vld [vmem:[#allocation2 + $0x20] sm:$0xf]
    %v40 = vld [vmem:[#allocation2 + $0x24] sm:$0xf]
    %v41 = vld [vmem:[#allocation2 + $0x28] sm:$0xf]
    %v42 = vld [vmem:[#allocation2 + $0x2c] sm:$0xf]
    %v43 = vld [vmem:[#allocation2 + $0x30] sm:$0xf]
    %v44 = vld [vmem:[#allocation2 + $0x34] sm:$0xf]
    %v45 = vld [vmem:[#allocation2 + $0x38] sm:$0xf]
    %v46 = vld [vmem:[#allocation2 + $0x3c] sm:$0xf]
    %v47 = vld [vmem:[%s2] sm:$0x1]
    %v49 = vlaneseq
    %v50 = vshrl.u32 %v49, 7
    %v51 = vsub.s32 0, %v50
    %v52 = vrot.slane %v47, %v51
    %v70 = vunpack.c.l.b16 %v31
    %v71 = vunpack.c.l.b16 %v32
    %v72 = vunpack.c.l.b16 %v33
    %v73 = vunpack.c.l.b16 %v34
    %v74 = vunpack.c.l.b16 %v35
    %v75 = vunpack.c.l.b16 %v36
    %v76 = vunpack.c.l.b16 %v37
    %v77 = vunpack.c.l.b16 %v38
    %v78 = vunpack.c.l.b16 %v39
    %v79 = vunpack.c.l.b16 %v40
    %v80 = vunpack.c.l.b16 %v41
    %v81 = vunpack.c.l.b16 %v42
    %v82 = vunpack.c.l.b16 %v43
    %v83 = vunpack.c.l.b16 %v44
    %v84 = vunpack.c.l.b16 %v45
    %v85 = vunpack.c.l.b16 %v46
    %v86 = vpack.c.b16 %v71, %v70
    %v87 = vpack.c.b16 %v73, %v72
    %v88 = vpack.c.b16 %v75, %v74
    %v89 = vpack.c.b16 %v77, %v76
    %v90 = vpack.c.b16 %v79, %v78
    %v91 = vpack.c.b16 %v81, %v80
    %v92 = vpack.c.b16 %v83, %v82
    %v93 = vpack.c.b16 %v85, %v84
    %102 = vmatprep.subr.bf16.mxu0 0
    %103 = vmatpush1.bf16.msra.mxu0 %v93
    %104 = vmatprep.subr.bf16.mxu0 0
    %105 = vmatpush1.bf16.msra.mxu0 %v92
    %106 = vmatprep.subr.bf16.mxu0 0
    %107 = vmatpush1.bf16.msra.mxu0 %v91
    %108 = vmatprep.subr.bf16.mxu0 0
    %109 = vmatpush1.bf16.msra.mxu0 %v90
    %110 = vmatprep.subr.bf16.mxu0 0
    %111 = vmatpush1.bf16.msra.mxu0 %v89
    %112 = vmatprep.subr.bf16.mxu0 0
    %113 = vmatpush1.bf16.msra.mxu0 %v88
    %114 = vmatprep.subr.bf16.mxu0 0
    %115 = vmatpush1.bf16.msra.mxu0 %v87
    %116 = vmatprep.subr.bf16.mxu0 0
    %117 = vmatpush1.bf16.msra.mxu0 %v86
    %118 = vmatprep.subr.bf16.mxu0 0
    %119 = vmatpush2.bf16.msra.mxu0 0
    %120 = vmatprep.subr.bf16.mxu0 0
    %121 = vmatpush2.bf16.msra.mxu0 0
    %122 = vmatprep.subr.bf16.mxu0 0
    %123 = vmatpush2.bf16.msra.mxu0 0
    %124 = vmatprep.subr.bf16.mxu0 0
    %125 = vmatpush2.bf16.msra.mxu0 0
    %126 = vmatprep.subr.bf16.mxu0 0
    %127 = vmatpush2.bf16.msra.mxu0 0
    %128 = vmatprep.subr.bf16.mxu0 0
    %129 = vmatpush2.bf16.msra.mxu0 0
    %130 = vmatprep.subr.bf16.mxu0 0
    %131 = vmatpush2.bf16.msra.mxu0 0
    %132 = vmatprep.subr.bf16.mxu0 0
    %133 = vmatpush2.bf16.msra.mxu0 0
    %134 = vmatprep.mubr.bf16.mxu0 0
    %135 = vmatmul.mubr.bf16.gmra.mxu0 %v30
    %v136 = vpop.f32.mrf.mxu0
    %v137 = vadd.f32 %v52, %v136
    %v138 = vpop.f32.mrf.mxu0
    %v139 = vpop.f32.mrf.mxu0
    %v140 = vpop.f32.mrf.mxu0
    %141 = vdwg.mxu0
    %v142 = vxor.u32 %v137, 2147483648
    %v143 = vmul.f32 %v142, 1.442695
    %v144 = vpow.pop %v143
    %v145 = vadd.f32 %v144, 1.0
    %v146 = vrcp.pop %v145
    %v147 = vmul.f32 1.0, %v146
    %v148 = vpack.c.bf16 %v147, %v147
    %s149 = scalar_lea.vmem [#allocation2], 64
    %v150 = vld [vmem:[%s149] sm:$0xf]
    %v151 = vld [vmem:[%s149 + $0x4] sm:$0xf]
    %v152 = vld [vmem:[%s149 + $0x8] sm:$0xf]
    %v153 = vld [vmem:[%s149 + $0xc] sm:$0xf]
    %v154 = vld [vmem:[%s149 + $0x10] sm:$0xf]
    %v155 = vld [vmem:[%s149 + $0x14] sm:$0xf]
    %v156 = vld [vmem:[%s149 + $0x18] sm:$0xf]
    %v157 = vld [vmem:[%s149 + $0x1c] sm:$0xf]
    %v158 = vld [vmem:[%s149 + $0x20] sm:$0xf]
    %v159 = vld [vmem:[%s149 + $0x24] sm:$0xf]
    %v160 = vld [vmem:[%s149 + $0x28] sm:$0xf]
    %v161 = vld [vmem:[%s149 + $0x2c] sm:$0xf]
    %v162 = vld [vmem:[%s149 + $0x30] sm:$0xf]
    %v163 = vld [vmem:[%s149 + $0x34] sm:$0xf]
    %v164 = vld [vmem:[%s149 + $0x38] sm:$0xf]
    %v165 = vld [vmem:[%s149 + $0x3c] sm:$0xf]
    %s166 = scalar_lea.vmem %s2, 1
    %v167 = vld [vmem:[%s166] sm:$0x1]
    %v169 = vlaneseq
    %v170 = vshrl.u32 %v169, 7
    %v171 = vsub.s32 0, %v170
    %v172 = vrot.slane %v167, %v171
    %v190 = vunpack.c.l.b16 %v150
    %v191 = vunpack.c.l.b16 %v151
    %v192 = vunpack.c.l.b16 %v152
    %v193 = vunpack.c.l.b16 %v153
    %v194 = vunpack.c.l.b16 %v154
    %v195 = vunpack.c.l.b16 %v155
    %v196 = vunpack.c.l.b16 %v156
    %v197 = vunpack.c.l.b16 %v157
    %v198 = vunpack.c.l.b16 %v158
    %v199 = vunpack.c.l.b16 %v159
    %v200 = vunpack.c.l.b16 %v160
    %v201 = vunpack.c.l.b16 %v161
    %v202 = vunpack.c.l.b16 %v162
    %v203 = vunpack.c.l.b16 %v163
    %v204 = vunpack.c.l.b16 %v164
    %v205 = vunpack.c.l.b16 %v165
    %v206 = vpack.c.b16 %v191, %v190
    %v207 = vpack.c.b16 %v193, %v192
    %v208 = vpack.c.b16 %v195, %v194
    %v209 = vpack.c.b16 %v197, %v196
    %v210 = vpack.c.b16 %v199, %v198
    %v211 = vpack.c.b16 %v201, %v200
    %v212 = vpack.c.b16 %v203, %v202
    %v213 = vpack.c.b16 %v205, %v204
    %222 = vmatprep.subr.bf16.mxu0 0
    %223 = vmatpush1.bf16.msra.mxu0 %v213
    %224 = vmatprep.subr.bf16.mxu0 0
    %225 = vmatpush1.bf16.msra.mxu0 %v212
    %226 = vmatprep.subr.bf16.mxu0 0
    %227 = vmatpush1.bf16.msra.mxu0 %v211
    %228 = vmatprep.subr.bf16.mxu0 0
    %229 = vmatpush1.bf16.msra.mxu0 %v210
    %230 = vmatprep.subr.bf16.mxu0 0
    %231 = vmatpush1.bf16.msra.mxu0 %v209
    %232 = vmatprep.subr.bf16.mxu0 0
    %233 = vmatpush1.bf16.msra.mxu0 %v208
    %234 = vmatprep.subr.bf16.mxu0 0
    %235 = vmatpush1.bf16.msra.mxu0 %v207
    %236 = vmatprep.subr.bf16.mxu0 0
    %237 = vmatpush1.bf16.msra.mxu0 %v206
    %238 = vmatprep.subr.bf16.mxu0 0
    %239 = vmatpush2.bf16.msra.mxu0 0
    %240 = vmatprep.subr.bf16.mxu0 0
    %241 = vmatpush2.bf16.msra.mxu0 0
    %242 = vmatprep.subr.bf16.mxu0 0
    %243 = vmatpush2.bf16.msra.mxu0 0
    %244 = vmatprep.subr.bf16.mxu0 0
    %245 = vmatpush2.bf16.msra.mxu0 0
    %246 = vmatprep.subr.bf16.mxu0 0
    %247 = vmatpush2.bf16.msra.mxu0 0
    %248 = vmatprep.subr.bf16.mxu0 0
    %249 = vmatpush2.bf16.msra.mxu0 0
    %250 = vmatprep.subr.bf16.mxu0 0
    %251 = vmatpush2.bf16.msra.mxu0 0
    %252 = vmatprep.subr.bf16.mxu0 0
    %253 = vmatpush2.bf16.msra.mxu0 0
    %254 = vmatprep.mubr.bf16.mxu0 0
    %255 = vmatmul.mubr.bf16.gmra.mxu0 %v148
    %v256 = vpop.f32.mrf.mxu0
    %v257 = vadd.f32 %v172, %v256
    %v258 = vpop.f32.mrf.mxu0
    %v259 = vpop.f32.mrf.mxu0
    %v260 = vpop.f32.mrf.mxu0
    %261 = vdwg.mxu0
    %v262 = vxor.u32 %v257, 2147483648
    %v263 = vmul.f32 %v262, 1.442695
    %v264 = vpow.pop %v263
    %v265 = vadd.f32 %v264, 1.0
    %v266 = vrcp.pop %v265
    %v267 = vmul.f32 1.0, %v266
    %v268 = vpack.c.bf16 %v267, %v267
    %s269 = scalar_lea.vmem [#allocation2], 128
    %v270 = vld [vmem:[%s269] sm:$0xf]
    %v271 = vld [vmem:[%s269 + $0x4] sm:$0xf]
    %v272 = vld [vmem:[%s269 + $0x8] sm:$0xf]
    %v273 = vld [vmem:[%s269 + $0xc] sm:$0xf]
    %v274 = vld [vmem:[%s269 + $0x10] sm:$0xf]
    %v275 = vld [vmem:[%s269 + $0x14] sm:$0xf]
    %v276 = vld [vmem:[%s269 + $0x18] sm:$0xf]
    %v277 = vld [vmem:[%s269 + $0x1c] sm:$0xf]
    %v278 = vld [vmem:[%s269 + $0x20] sm:$0xf]
    %v279 = vld [vmem:[%s269 + $0x24] sm:$0xf]
    %v280 = vld [vmem:[%s269 + $0x28] sm:$0xf]
    %v281 = vld [vmem:[%s269 + $0x2c] sm:$0xf]
    %v282 = vld [vmem:[%s269 + $0x30] sm:$0xf]
    %v283 = vld [vmem:[%s269 + $0x34] sm:$0xf]
    %v284 = vld [vmem:[%s269 + $0x38] sm:$0xf]
    %v285 = vld [vmem:[%s269 + $0x3c] sm:$0xf]
    %s286 = scalar_lea.vmem %s2, 2
    %v287 = vld [vmem:[%s286] sm:$0x1]
    %v289 = vlaneseq
    %v290 = vshrl.u32 %v289, 7
    %v291 = vsub.s32 0, %v290
    %v292 = vrot.slane %v287, %v291
    %v310 = vunpack.c.l.b16 %v270
    %v311 = vunpack.c.l.b16 %v271
    %v312 = vunpack.c.l.b16 %v272
    %v313 = vunpack.c.l.b16 %v273
    %v314 = vunpack.c.l.b16 %v274
    %v315 = vunpack.c.l.b16 %v275
    %v316 = vunpack.c.l.b16 %v276
    %v317 = vunpack.c.l.b16 %v277
    %v318 = vunpack.c.l.b16 %v278
    %v319 = vunpack.c.l.b16 %v279
    %v320 = vunpack.c.l.b16 %v280
    %v321 = vunpack.c.l.b16 %v281
    %v322 = vunpack.c.l.b16 %v282
    %v323 = vunpack.c.l.b16 %v283
    %v324 = vunpack.c.l.b16 %v284
    %v325 = vunpack.c.l.b16 %v285
    %v326 = vpack.c.b16 %v311, %v310
    %v327 = vpack.c.b16 %v313, %v312
    %v328 = vpack.c.b16 %v315, %v314
    %v329 = vpack.c.b16 %v317, %v316
    %v330 = vpack.c.b16 %v319, %v318
    %v331 = vpack.c.b16 %v321, %v320
    %v332 = vpack.c.b16 %v323, %v322
    %v333 = vpack.c.b16 %v325, %v324
    %342 = vmatprep.subr.bf16.mxu0 0
    %343 = vmatpush1.bf16.msra.mxu0 %v333
    %344 = vmatprep.subr.bf16.mxu0 0
    %345 = vmatpush1.bf16.msra.mxu0 %v332
    %346 = vmatprep.subr.bf16.mxu0 0
    %347 = vmatpush1.bf16.msra.mxu0 %v331
    %348 = vmatprep.subr.bf16.mxu0 0
    %349 = vmatpush1.bf16.msra.mxu0 %v330
    %350 = vmatprep.subr.bf16.mxu0 0
    %351 = vmatpush1.bf16.msra.mxu0 %v329
    %352 = vmatprep.subr.bf16.mxu0 0
    %353 = vmatpush1.bf16.msra.mxu0 %v328
    %354 = vmatprep.subr.bf16.mxu0 0
    %355 = vmatpush1.bf16.msra.mxu0 %v327
    %356 = vmatprep.subr.bf16.mxu0 0
    %357 = vmatpush1.bf16.msra.mxu0 %v326
    %358 = vmatprep.subr.bf16.mxu0 0
    %359 = vmatpush2.bf16.msra.mxu0 0
    %360 = vmatprep.subr.bf16.mxu0 0
    %361 = vmatpush2.bf16.msra.mxu0 0
    %362 = vmatprep.subr.bf16.mxu0 0
    %363 = vmatpush2.bf16.msra.mxu0 0
    %364 = vmatprep.subr.bf16.mxu0 0
    %365 = vmatpush2.bf16.msra.mxu0 0
    %366 = vmatprep.subr.bf16.mxu0 0
    %367 = vmatpush2.bf16.msra.mxu0 0
    %368 = vmatprep.subr.bf16.mxu0 0
    %369 = vmatpush2.bf16.msra.mxu0 0
    %370 = vmatprep.subr.bf16.mxu0 0
    %371 = vmatpush2.bf16.msra.mxu0 0
    %372 = vmatprep.subr.bf16.mxu0 0
    %373 = vmatpush2.bf16.msra.mxu0 0
    %374 = vmatprep.mubr.bf16.mxu0 0
    %375 = vmatmul.mubr.bf16.gmra.mxu0 %v268
    %v376 = vpop.f32.mrf.mxu0
    %v377 = vadd.f32 %v292, %v376
    %v378 = vpop.f32.mrf.mxu0
    %v379 = vpop.f32.mrf.mxu0
    %v380 = vpop.f32.mrf.mxu0
    %381 = vdwg.mxu0
    %v382 = vxor.u32 %v377, 2147483648
    %v383 = vmul.f32 %v382, 1.442695
    %v384 = vpow.pop %v383
    %v385 = vadd.f32 %v384, 1.0
    %v386 = vrcp.pop %v385
    %v387 = vmul.f32 1.0, %v386
    %v388 = vpack.c.bf16 %v387, %v387
    %s389 = scalar_lea.vmem [#allocation2], 192
    %v390 = vld [vmem:[%s389] sm:$0xf]
    %v391 = vld [vmem:[%s389 + $0x4] sm:$0xf]
    %v392 = vld [vmem:[%s389 + $0x8] sm:$0xf]
    %v393 = vld [vmem:[%s389 + $0xc] sm:$0xf]
    %v394 = vld [vmem:[%s389 + $0x10] sm:$0xf]
    %v395 = vld [vmem:[%s389 + $0x14] sm:$0xf]
    %v396 = vld [vmem:[%s389 + $0x18] sm:$0xf]
    %v397 = vld [vmem:[%s389 + $0x1c] sm:$0xf]
    %v398 = vld [vmem:[%s389 + $0x20] sm:$0xf]
    %v399 = vld [vmem:[%s389 + $0x24] sm:$0xf]
    %v400 = vld [vmem:[%s389 + $0x28] sm:$0xf]
    %v401 = vld [vmem:[%s389 + $0x2c] sm:$0xf]
    %v402 = vld [vmem:[%s389 + $0x30] sm:$0xf]
    %v403 = vld [vmem:[%s389 + $0x34] sm:$0xf]
    %v404 = vld [vmem:[%s389 + $0x38] sm:$0xf]
    %v405 = vld [vmem:[%s389 + $0x3c] sm:$0xf]
    %s406 = scalar_lea.vmem %s2, 3
    %v407 = vld [vmem:[%s406] sm:$0x1]
    %v409 = vlaneseq
    %v410 = vshrl.u32 %v409, 7
    %v411 = vsub.s32 0, %v410
    %v412 = vrot.slane %v407, %v411
    %v430 = vunpack.c.l.b16 %v390
    %v431 = vunpack.c.l.b16 %v391
    %v432 = vunpack.c.l.b16 %v392
    %v433 = vunpack.c.l.b16 %v393
    %v434 = vunpack.c.l.b16 %v394
    %v435 = vunpack.c.l.b16 %v395
    %v436 = vunpack.c.l.b16 %v396
    %v437 = vunpack.c.l.b16 %v397
    %v438 = vunpack.c.l.b16 %v398
    %v439 = vunpack.c.l.b16 %v399
    %v440 = vunpack.c.l.b16 %v400
    %v441 = vunpack.c.l.b16 %v401
    %v442 = vunpack.c.l.b16 %v402
    %v443 = vunpack.c.l.b16 %v403
    %v444 = vunpack.c.l.b16 %v404
    %v445 = vunpack.c.l.b16 %v405
    %v446 = vpack.c.b16 %v431, %v430
    %v447 = vpack.c.b16 %v433, %v432
    %v448 = vpack.c.b16 %v435, %v434
    %v449 = vpack.c.b16 %v437, %v436
    %v450 = vpack.c.b16 %v439, %v438
    %v451 = vpack.c.b16 %v441, %v440
    %v452 = vpack.c.b16 %v443, %v442
    %v453 = vpack.c.b16 %v445, %v444
    %462 = vmatprep.subr.bf16.mxu0 0
    %463 = vmatpush1.bf16.msra.mxu0 %v453
    %464 = vmatprep.subr.bf16.mxu0 0
    %465 = vmatpush1.bf16.msra.mxu0 %v452
    %466 = vmatprep.subr.bf16.mxu0 0
    %467 = vmatpush1.bf16.msra.mxu0 %v451
    %468 = vmatprep.subr.bf16.mxu0 0
    %469 = vmatpush1.bf16.msra.mxu0 %v450
    %470 = vmatprep.subr.bf16.mxu0 0
    %471 = vmatpush1.bf16.msra.mxu0 %v449
    %472 = vmatprep.subr.bf16.mxu0 0
    %473 = vmatpush1.bf16.msra.mxu0 %v448
    %474 = vmatprep.subr.bf16.mxu0 0
    %475 = vmatpush1.bf16.msra.mxu0 %v447
    %476 = vmatprep.subr.bf16.mxu0 0
    %477 = vmatpush1.bf16.msra.mxu0 %v446
    %478 = vmatprep.subr.bf16.mxu0 0
    %479 = vmatpush2.bf16.msra.mxu0 0
    %480 = vmatprep.subr.bf16.mxu0 0
    %481 = vmatpush2.bf16.msra.mxu0 0
    %482 = vmatprep.subr.bf16.mxu0 0
    %483 = vmatpush2.bf16.msra.mxu0 0
    %484 = vmatprep.subr.bf16.mxu0 0
    %485 = vmatpush2.bf16.msra.mxu0 0
    %486 = vmatprep.subr.bf16.mxu0 0
    %487 = vmatpush2.bf16.msra.mxu0 0
    %488 = vmatprep.subr.bf16.mxu0 0
    %489 = vmatpush2.bf16.msra.mxu0 0
    %490 = vmatprep.subr.bf16.mxu0 0
    %491 = vmatpush2.bf16.msra.mxu0 0
    %492 = vmatprep.subr.bf16.mxu0 0
    %493 = vmatpush2.bf16.msra.mxu0 0
    %494 = vmatprep.mubr.bf16.mxu0 0
    %495 = vmatmul.mubr.bf16.gmra.mxu0 %v388
    %v496 = vpop.f32.mrf.mxu0
    %v497 = vadd.f32 %v412, %v496
    %v498 = vpop.f32.mrf.mxu0
    %v499 = vpop.f32.mrf.mxu0
    %v500 = vpop.f32.mrf.mxu0
    %501 = vdwg.mxu0
    %v502 = vxor.u32 %v497, 2147483648
    %v503 = vmul.f32 %v502, 1.442695
    %v504 = vpow.pop %v503
    %v505 = vadd.f32 %v504, 1.0
    %v506 = vrcp.pop %v505
    %v507 = vmul.f32 1.0, %v506
    %v508 = vpack.c.bf16 %v507, %v507
    %s509 = scalar_lea.vmem [#allocation2], 256
    %v510 = vld [vmem:[%s509] sm:$0xf]
    %v511 = vld [vmem:[%s509 + $0x4] sm:$0xf]
    %v512 = vld [vmem:[%s509 + $0x8] sm:$0xf]
    %v513 = vld [vmem:[%s509 + $0xc] sm:$0xf]
    %v514 = vld [vmem:[%s509 + $0x10] sm:$0xf]
    %v515 = vld [vmem:[%s509 + $0x14] sm:$0xf]
    %v516 = vld [vmem:[%s509 + $0x18] sm:$0xf]
    %v517 = vld [vmem:[%s509 + $0x1c] sm:$0xf]
    %v518 = vld [vmem:[%s509 + $0x20] sm:$0xf]
    %v519 = vld [vmem:[%s509 + $0x24] sm:$0xf]
    %v520 = vld [vmem:[%s509 + $0x28] sm:$0xf]
    %v521 = vld [vmem:[%s509 + $0x2c] sm:$0xf]
    %v522 = vld [vmem:[%s509 + $0x30] sm:$0xf]
    %v523 = vld [vmem:[%s509 + $0x34] sm:$0xf]
    %v524 = vld [vmem:[%s509 + $0x38] sm:$0xf]
    %v525 = vld [vmem:[%s509 + $0x3c] sm:$0xf]
    %s526 = scalar_lea.vmem %s2, 4
    %v527 = vld [vmem:[%s526] sm:$0x1]
    %v529 = vlaneseq
    %v530 = vshrl.u32 %v529, 7
    %v531 = vsub.s32 0, %v530
    %v532 = vrot.slane %v527, %v531
    %v550 = vunpack.c.l.b16 %v510
    %v551 = vunpack.c.l.b16 %v511
    %v552 = vunpack.c.l.b16 %v512
    %v553 = vunpack.c.l.b16 %v513
    %v554 = vunpack.c.l.b16 %v514
    %v555 = vunpack.c.l.b16 %v515
    %v556 = vunpack.c.l.b16 %v516
    %v557 = vunpack.c.l.b16 %v517
    %v558 = vunpack.c.l.b16 %v518
    %v559 = vunpack.c.l.b16 %v519
    %v560 = vunpack.c.l.b16 %v520
    %v561 = vunpack.c.l.b16 %v521
    %v562 = vunpack.c.l.b16 %v522
    %v563 = vunpack.c.l.b16 %v523
    %v564 = vunpack.c.l.b16 %v524
    %v565 = vunpack.c.l.b16 %v525
    %v566 = vpack.c.b16 %v551, %v550
    %v567 = vpack.c.b16 %v553, %v552
    %v568 = vpack.c.b16 %v555, %v554
    %v569 = vpack.c.b16 %v557, %v556
    %v570 = vpack.c.b16 %v559, %v558
    %v571 = vpack.c.b16 %v561, %v560
    %v572 = vpack.c.b16 %v563, %v562
    %v573 = vpack.c.b16 %v565, %v564
    %582 = vmatprep.subr.bf16.mxu0 0
    %583 = vmatpush1.bf16.msra.mxu0 %v573
    %584 = vmatprep.subr.bf16.mxu0 0
    %585 = vmatpush1.bf16.msra.mxu0 %v572
    %586 = vmatprep.subr.bf16.mxu0 0
    %587 = vmatpush1.bf16.msra.mxu0 %v571
    %588 = vmatprep.subr.bf16.mxu0 0
    %589 = vmatpush1.bf16.msra.mxu0 %v570
    %590 = vmatprep.subr.bf16.mxu0 0
    %591 = vmatpush1.bf16.msra.mxu0 %v569
    %592 = vmatprep.subr.bf16.mxu0 0
    %593 = vmatpush1.bf16.msra.mxu0 %v568
    %594 = vmatprep.subr.bf16.mxu0 0
    %595 = vmatpush1.bf16.msra.mxu0 %v567
    %596 = vmatprep.subr.bf16.mxu0 0
    %597 = vmatpush1.bf16.msra.mxu0 %v566
    %598 = vmatprep.subr.bf16.mxu0 0
    %599 = vmatpush2.bf16.msra.mxu0 0
    %600 = vmatprep.subr.bf16.mxu0 0
    %601 = vmatpush2.bf16.msra.mxu0 0
    %602 = vmatprep.subr.bf16.mxu0 0
    %603 = vmatpush2.bf16.msra.mxu0 0
    %604 = vmatprep.subr.bf16.mxu0 0
    %605 = vmatpush2.bf16.msra.mxu0 0
    %606 = vmatprep.subr.bf16.mxu0 0
    %607 = vmatpush2.bf16.msra.mxu0 0
    %608 = vmatprep.subr.bf16.mxu0 0
    %609 = vmatpush2.bf16.msra.mxu0 0
    %610 = vmatprep.subr.bf16.mxu0 0
    %611 = vmatpush2.bf16.msra.mxu0 0
    %612 = vmatprep.subr.bf16.mxu0 0
    %613 = vmatpush2.bf16.msra.mxu0 0
    %614 = vmatprep.mubr.bf16.mxu0 0
    %615 = vmatmul.mubr.bf16.gmra.mxu0 %v508
    %v616 = vpop.f32.mrf.mxu0
    %v617 = vadd.f32 %v532, %v616
    %v618 = vpop.f32.mrf.mxu0
    %v619 = vpop.f32.mrf.mxu0
    %v620 = vpop.f32.mrf.mxu0
    %621 = vdwg.mxu0
    %v622 = vxor.u32 %v617, 2147483648
    %v623 = vmul.f32 %v622, 1.442695
    %v624 = vpow.pop %v623
    %v625 = vadd.f32 %v624, 1.0
    %v626 = vrcp.pop %v625
    %v627 = vmul.f32 1.0, %v626
    %628 = vst [vmem:[%s3] sm:$0xff] %v627
    // Predicated region
    $region18: #{net_forward.1} parent=1 // pred_check
      _
    $region19: #{net_forward.1} parent=1 // pred_check_branch
      %630 = sbr.rel (0) target = $region21
    $region20: #{net_forward.1} parent=1 // pred_region
      _
    $region21: #{net_forward.1} parent=1 // pred_fallthru
      _
    // Predicated region
    $region22: #{net_forward.1} parent=1 // pred_check
      _
    $region23: #{net_forward.1} parent=1 // pred_check_branch
      %632 = sbr.rel (0) target = $region25
    $region24: #{net_forward.1} parent=1 // pred_region
      _
    $region25: #{net_forward.1} parent=1 // pred_fallthru
      _
    %633 = vsyncpa [#allocation3], 1

</llo_original>
